<compile_context>
chip_gen: v5e
topology: v5e:2x2
jax: 0.10.0
libtpu: 0.0.40
codegen_flags: <defaults>
</compile_context>

<pallas_src>
import jax
import jax.numpy as jnp
from jax.experimental import pallas as pl
from jax.experimental.pallas import tpu as pltpu


def _round_up(x, m):
    return (x + m - 1) // m * m


def _vmem_capacity_bytes():
    """Physical per-core VMEM (128 MiB on v5e/v6e, 64 MiB on v7x); safe fallback."""
    try:
        info = pltpu.get_tpu_info()
        cap = int(getattr(info, "vmem_capacity_bytes", 0) or 0)
        if cap > 0:
            return cap
    except Exception:
        pass
    return 64 * 1024 * 1024  # conservative (v7x-sized) assumption


def _make_kernel(mul_dtype):
    def kernel(l_ref, mt_ref, sel_ref, r_ref, o_ref):
        # l_ref:  (TB, U)        mt_ref: (U, TN*U)   [map tiled TN times along columns]
        # sel_ref:(TN*U, TN)     r_ref:  (TB, TN*U)  o_ref: (TN, TB)
        # (1) MXU: lm_rep[b, n*U+u] = (l @ map)[b, u]  -- broadcast over n for free.
        lm_rep = jnp.dot(l_ref[...].astype(mul_dtype), mt_ref[...],
                         preferred_element_type=mul_dtype)
        # (2) VPU: elementwise product against the lane-dense r tile (native dtype).
        prod = lm_rep * r_ref[...].astype(mul_dtype)
        # (3) MXU: U-reduction via the 0/1 selection matrix, f32 accumulation.
        res = jnp.dot(prod, sel_ref[...], preferred_element_type=jnp.float32)  # (TB, TN)
        # (4) tiny transpose -> lane-dense store with the big TB axis on the lanes.
        o_ref[...] = res.T.astype(o_ref.dtype)
    return kernel


def bilinear_map(l, r, bmap, *, max_tb=8192):
    """Pallas implementation of BilinearMap.forward.

    l: (B, ncon, 1, nunits), r: (B, ncon, nneg, nunits), bmap: (nunits, nunits)
    returns: (B, ncon, nneg)
    """
    B, ncon, one, U = l.shape
    assert one == 1, "l must have shape (B, ncon, 1, nunits)"
    nneg = r.shape[2]
    BC = B * ncon
    out_dtype = jnp.result_type(l.dtype, r.dtype, bmap.dtype)
    # Multiply in bf16 when everything is bf16 (bf16-native VPU on v6e/v7x),
    # otherwise in f32.  Accumulation of the reduction is always f32 (MXU).
    if jnp.dtype(out_dtype) == jnp.dtype(jnp.bfloat16):
        mul_dtype = jnp.bfloat16
    else:
        mul_dtype = jnp.float32

    l2 = l.reshape(BC, U)
    r2 = r.reshape(BC, nneg * U)  # lane-dense r stream (contiguous, free reshape)

    r_item = jnp.dtype(r.dtype).itemsize
    l_item = jnp.dtype(l.dtype).itemsize
    m_item = jnp.dtype(mul_dtype).itemsize
    o_item = jnp.dtype(out_dtype).itemsize

    # ---------- generation-aware VMEM budget ----------
    phys = _vmem_capacity_bytes()
    vmem_limit = min(phys // 2, 64 * 1024 * 1024)   # 64 MiB (v5e/v6e), 32 MiB (v7x)
    usable = int(vmem_limit * 0.75)                  # headroom for compiler temporaries

    def row_bytes(tn):
        # Per-BC-row VMEM cost: r double-buffer + l double-buffer
        # + lm_rep + prod intermediates + small res/out slack.
        return (2 * tn * U * r_item + 2 * U * l_item
                + 2 * tn * U * m_item + 4 * tn * 4)

    def const_bytes(tn):
        # Resident constants (tiled map block + selection block), double-buffered.
        return 2 * (U * tn * U + tn * U * tn) * m_item

    # ---------- choose TN (nneg columns per block); normally TN == nneg ----------
    tn_candidates = sorted(
        {nneg, *[t for t in range(8, nneg, 8) if (t * U) % 128 == 0]}, reverse=True)
    TN = tn_candidates[-1]
    for cand in tn_candidates:
        if row_bytes(cand) * min(BC, 128) + const_bytes(cand) <= usable:
            TN = cand
            break
    # TODO(synk): if even the smallest legal TN cannot fit (gigantic U), also split the
    # U axis and accumulate across U-blocks in a VMEM scratch under @pl.when(u_idx == 0).

    # ---------- choose TB (BC rows per block) from the remaining budget ----------
    budget_rows = max(1, (usable - const_bytes(TN)) // row_bytes(TN))
    tb_budget = min(max_tb, max(128, budget_rows // 128 * 128))
    if BC >= 256:
        # >=2 row tiles so the "parallel" axis spans both v7x TensorCores; multiples
        # of 128 so the lane-dense output stores are unmasked vst.
        TB = max(128, min(tb_budget, _round_up(pl.cdiv(BC, 2), 128)))
    else:
        TB = BC  # single full-dim row tile (legal for any size)

    num_i = pl.cdiv(BC, TB)
    num_j = pl.cdiv(nneg, TN)

    # Block-sized constants (identical for every nneg block, so they can be
    # passed as full, resident arrays regardless of how nneg is split).
    map_blk = jnp.tile(bmap.astype(mul_dtype), (1, TN))             # (U, TN*U)
    sel_blk = jnp.repeat(jnp.eye(TN, dtype=mul_dtype), U, axis=0)   # (TN*U, TN)

    cost = pl.CostEstimate(
        flops=2 * BC * U * U + 3 * BC * nneg * U,
        transcendentals=0,
        bytes_accessed=(l2.size * l_item + r2.size * r_item
                        + map_blk.size * m_item + sel_blk.size * m_item
                        + BC * nneg * o_item),
    )

    out_t = pl.pallas_call(
        _make_kernel(mul_dtype),
        out_shape=jax.ShapeDtypeStruct((nneg, BC), out_dtype),
        grid=(num_i, num_j),
        in_specs=[
            pl.BlockSpec((TB, U), lambda i, j: (i, 0)),           # l rows
            pl.BlockSpec((U, TN * U), lambda i, j: (0, 0)),       # tiled map (resident)
            pl.BlockSpec((TN * U, TN), lambda i, j: (0, 0)),      # 0/1 selection (resident)
            pl.BlockSpec((TB, TN * U), lambda i, j: (i, j)),      # r: dominant DMA stream
        ],
        out_specs=pl.BlockSpec((TN, TB), lambda i, j: (j, i)),    # lane-dense output
        compiler_params=pltpu.CompilerParams(
            dimension_semantics=("parallel", "parallel"),
            vmem_limit_bytes=int(vmem_limit),
        ),
        cost_estimate=cost,
    )(l2, map_blk, sel_blk, r2)

    # Undo the lane-dense output layout outside the kernel (tiny: BC*nneg elements).
    return out_t.T.reshape(B, ncon, nneg)


def bilinear_map_ref(l, r, bmap):
    """Pure-JAX reference mirroring the PyTorch forward."""
    B, ncon, _, U = l.shape
    first = (l.reshape(-1, U) @ bmap).reshape(B, ncon, 1, U)
    return jnp.sum(first * r, axis=-1)


if __name__ == "__main__":
    B, ncon, nneg, nunits = 2, 4, 8, 32
    key = jax.random.PRNGKey(0)
    kl, kr, km, kl2, kr2 = jax.random.split(key, 5)

    # Integer-valued test data: every product / partial sum is exactly representable
    # whatever f32-matmul pass count the MXU uses, so these checks are independent of
    # the backend's matmul precision mode while still exercising all of the kernel's
    # indexing / tiling / layout logic.
    def ints(k, shape):
        return jax.random.randint(k, shape, -2, 3).astype(jnp.float32)

    # Test 1: module's init (identity map, nn.init.eye_), single-tile path (BC = 8).
    bmap_eye = jnp.eye(nunits, dtype=jnp.float32)
    l = ints(kl, (B, ncon, 1, nunits))
    r = ints(kr, (B, ncon, nneg, nunits))
    out = jax.block_until_ready(bilinear_map(l, r, bmap_eye))
    ref = bilinear_map_ref(l, r, bmap_eye)
    assert out.shape == (B, ncon, nneg), out.shape
    assert jnp.allclose(out, ref, atol=1e-5, rtol=1e-5), "mismatch vs reference"

    # Test 2: general (non-identity) map, multi-tile + ragged-tail path
    # (BC = 600 -> TB = 384, grid = (2, 1), last row-tile is a partial block).
    B2, ncon2 = 3, 200
    bmap_gen = ints(km, (nunits, nunits))
    l_big = ints(kl2, (B2, ncon2, 1, nunits))
    r_big = ints(kr2, (B2, ncon2, nneg, nunits))
    out_big = jax.block_until_ready(bilinear_map(l_big, r_big, bmap_gen))
    ref_big = bilinear_map_ref(l_big, r_big, bmap_gen)
    assert out_big.shape == (B2, ncon2, nneg), out_big.shape
    assert jnp.allclose(out_big, ref_big, atol=1e-5, rtol=1e-5), "mismatch (tiled path)"

    print("KERNEL_OK")
</pallas_src>

<mosaic_0001>
module attributes {stable_mosaic.version = 11 : i64} {
  func.func @kernel(%arg0: i32, %arg1: i32, %arg2: memref<8x32xf32, #tpu.memory_space<vmem>>, %arg3: memref<32x256xf32, #tpu.memory_space<vmem>>, %arg4: memref<256x8xf32, #tpu.memory_space<vmem>>, %arg5: memref<8x256xf32, #tpu.memory_space<vmem>>, %arg6: memref<8x8xf32, #tpu.memory_space<vmem>>) attributes {dimension_semantics = [#tpu.dimension_semantics<parallel>, #tpu.dimension_semantics<parallel>], iteration_bounds = array<i64: 1, 1>, scalar_prefetch = 0 : i64, scratch_operands = 0 : i64, tpu.core_type = #tpu.core_type<tc>, window_params = [{transform_indices = @transform_0, window_bounds = array<i64: 8, 32>}, {pipeline_mode = #tpu.pipeline_mode<synchronous>, transform_indices = @transform_1, window_bounds = array<i64: 32, 256>}, {pipeline_mode = #tpu.pipeline_mode<synchronous>, transform_indices = @transform_2, window_bounds = array<i64: 256, 8>}, {transform_indices = @transform_3, window_bounds = array<i64: 8, 256>}, {transform_indices = @transform_4, window_bounds = array<i64: 8, 8>}]} {
    %c0 = arith.constant 0 : index
    %c0_0 = arith.constant 0 : index
    %0 = vector.load %arg2[%c0, %c0_0] : memref<8x32xf32, #tpu.memory_space<vmem>>, vector<8x32xf32>
    %c0_1 = arith.constant 0 : index
    %c0_2 = arith.constant 0 : index
    %1 = vector.load %arg3[%c0_1, %c0_2] : memref<32x256xf32, #tpu.memory_space<vmem>>, vector<32x256xf32>
    %cst = arith.constant dense<0.000000e+00> : vector<8x256xf32>
    %2 = tpu.matmul %0, %1, %cst {dimension_numbers = #tpu.dot_dimension_numbers<[1], [0], [0], [1], [0, 0, 1, 1], [], []>} : vector<8x32xf32>, vector<32x256xf32>, vector<8x256xf32> -> vector<8x256xf32>
    %c0_3 = arith.constant 0 : index
    %c0_4 = arith.constant 0 : index
    %3 = vector.load %arg5[%c0_3, %c0_4] : memref<8x256xf32, #tpu.memory_space<vmem>>, vector<8x256xf32>
    %4 = arith.mulf %2, %3 : vector<8x256xf32>
    %c0_5 = arith.constant 0 : index
    %c0_6 = arith.constant 0 : index
    %5 = vector.load %arg4[%c0_5, %c0_6] : memref<256x8xf32, #tpu.memory_space<vmem>>, vector<256x8xf32>
    %cst_7 = arith.constant dense<0.000000e+00> : vector<8x8xf32>
    %6 = tpu.matmul %4, %5, %cst_7 {dimension_numbers = #tpu.dot_dimension_numbers<[1], [0], [0], [1], [0, 0, 1, 1], [], []>} : vector<8x256xf32>, vector<256x8xf32>, vector<8x8xf32> -> vector<8x8xf32>
    %7 = tpu.transpose %6, [1, 0] : vector<8x8xf32> -> vector<8x8xf32>
    %c0_8 = arith.constant 0 : index
    %c0_9 = arith.constant 0 : index
    %8 = vector.load %arg6[%c0_8, %c0_9] : memref<8x8xf32, #tpu.memory_space<vmem>>, vector<8x8xf32>
    tpu.vector_store %arg6[%c0_8, %c0_9], %7 {strides = array<i32>} : memref<8x8xf32, #tpu.memory_space<vmem>>, vector<8x8xf32>,
    return
  }
  func.func @transform_0(%arg0: i32, %arg1: i32) -> (i32, i32) {
    %c0_i32 = arith.constant 0 : i32
    %c0_i32_0 = arith.constant 0 : i32
    return %arg0, %c0_i32 : i32, i32
  }
  func.func @transform_1(%arg0: i32, %arg1: i32) -> (i32, i32) {
    %c0_i32 = arith.constant 0 : i32
    %c0_i32_0 = arith.constant 0 : i32
    %c0_i32_1 = arith.constant 0 : i32
    return %c0_i32, %c0_i32_0 : i32, i32
  }
  func.func @transform_2(%arg0: i32, %arg1: i32) -> (i32, i32) {
    %c0_i32 = arith.constant 0 : i32
    %c0_i32_0 = arith.constant 0 : i32
    %c0_i32_1 = arith.constant 0 : i32
    return %c0_i32, %c0_i32_0 : i32, i32
  }
  func.func @transform_3(%arg0: i32, %arg1: i32) -> (i32, i32) {
    %c0_i32 = arith.constant 0 : i32
    return %arg0, %arg1 : i32, i32
  }
  func.func @transform_4(%arg0: i32, %arg1: i32) -> (i32, i32) {
    %c0_i32 = arith.constant 0 : i32
    return %arg1, %arg0 : i32, i32
  }
}

</mosaic_0001>

<llo_original>
// kernel: tpu_custom_call.1
$region0: #{tpu_custom_call.1}
  #allocation0 [shape = 'u32[]', space=smem, size = 0x4, offset = 0x4, fixed_abs, tag = 'smem constant byte address 0x4 - core index']
  #allocation1 [shape = 'u32[72,128]{1,0:T(1,128)}', space=vmem, size = 0x9000, scoped, tag = 'internal scratch']
  %s0 = inlined_call_operand.vmem [shape: f32[8,32], index: 0, kind: input, shape index: {}]
  %s1 = inlined_call_operand.vmem [shape: f32[32,256], index: 1, kind: input, shape index: {}]
  %s2 = inlined_call_operand.vmem [shape: f32[256,8], index: 2, kind: input, shape index: {}]
  %s3 = inlined_call_operand.vmem [shape: f32[8,256], index: 3, kind: input, shape index: {}]
  %s4 = inlined_call_operand.hbm [shape: f32[8,8], index: 4, kind: output, shape index: {}]
  %s5 = sld [smem:[#allocation0]]
  $region26: #{tpu_custom_call.1} parent=0
    _
  %s7 = ssub.s32 1, %s5
  %s8 = scalar_select 0, %s7, %s5
  $region1: #{tpu_custom_call.1} parent=0
    #allocation2 [shape = 'u8[4096]{0}', space=vmem, size = 0x1000, scoped, tag = 'output window, operand 0, single buffered']
    #allocation3 [shape = 's32[1]{0}', space=sflag, size = 0x4, scoped, tag = 'scoped memory for tpu_custom_call.1']
    %9 = vsyncpa [#allocation3], 0
    // Predicated region
    $region2: #{tpu_custom_call.1} parent=1 // pred_check
      _
    $region3: #{tpu_custom_call.1} parent=1 // pred_check_branch
      %11 = sbr.rel (0) target = $region5
    $region4: #{tpu_custom_call.1} parent=1 // pred_region
      _
    $region5: #{tpu_custom_call.1} parent=1 // pred_fallthru
      _
    // Predicated region
    $region6: #{tpu_custom_call.1} parent=1 // pred_check
      _
    $region7: #{tpu_custom_call.1} parent=1 // pred_check_branch
      %13 = sbr.rel (0) target = $region9
    $region8: #{tpu_custom_call.1} parent=1 // pred_region
      _
    $region9: #{tpu_custom_call.1} parent=1 // pred_fallthru
      _
    // Predicated region
    $region10: #{tpu_custom_call.1} parent=1 // pred_check
      _
    $region11: #{tpu_custom_call.1} parent=1 // pred_check_branch
      %15 = sbr.rel (0) target = $region13
    $region12: #{tpu_custom_call.1} parent=1 // pred_region
      _
    $region13: #{tpu_custom_call.1} parent=1 // pred_fallthru
      _
    // Predicated region
    $region14: #{tpu_custom_call.1} parent=1 // pred_check
      _
    $region15: #{tpu_custom_call.1} parent=1 // pred_check_branch
      %17 = sbr.rel (0) target = $region17
    $region16: #{tpu_custom_call.1} parent=1 // pred_region
      _
    $region17: #{tpu_custom_call.1} parent=1 // pred_fallthru
      _
    %v18 = vld [vmem:[%s0] sm:$0xff]
    %v19 = vld [vmem:[%s1] sm:$0xff]
    %v20 = vld [vmem:[%s1 + $0x8] sm:$0xff]
    %v21 = vld [vmem:[%s1 + $0x10] sm:$0xff]
    %v22 = vld [vmem:[%s1 + $0x18] sm:$0xff]
    %v23 = vld [vmem:[%s1 + $0x20] sm:$0xff]
    %v24 = vld [vmem:[%s1 + $0x28] sm:$0xff]
    %v25 = vld [vmem:[%s1 + $0x30] sm:$0xff]
    %v26 = vld [vmem:[%s1 + $0x38] sm:$0xff]
    %vm27 = vcmask 261120
    %v29 = vsel %vm27, %v18, 0
    %31 = vmatpush.msra.mxu0 0.0
    %32 = vmatpush.msra.mxu0 0.0
    %33 = vmatpush.msra.mxu0 0.0
    %34 = vmatpush.msra.mxu0 0.0
    %35 = vmatpush.msra.mxu0 0.0
    %36 = vmatpush.msra.mxu0 0.0
    %37 = vmatpush.msra.mxu0 0.0
    %38 = vmatpush.msra.mxu0 0.0
    %39 = vmatpush.msra.mxu0 0.0
    %40 = vmatpush.msra.mxu0 0.0
    %41 = vmatpush.msra.mxu0 0.0
    %42 = vmatpush.msra.mxu0 0.0
    %43 = vmatpush.msra.mxu0 %v25
    %44 = vmatpush.msra.mxu0 %v23
    %45 = vmatpush.msra.mxu0 %v21
    %46 = vmatpush.msra.mxu0 %v19
    %47 = vmatmul.f32.gmra.mxu0 %v29
    %v48 = vpop.f32.mrf.mxu0
    %v49 = vadd.f32 0.0, %v48
    %50 = vdwg.mxu0
    %51 = vmatpush.msra.mxu0 0.0
    %52 = vmatpush.msra.mxu0 0.0
    %53 = vmatpush.msra.mxu0 0.0
    %54 = vmatpush.msra.mxu0 0.0
    %55 = vmatpush.msra.mxu0 0.0
    %56 = vmatpush.msra.mxu0 0.0
    %57 = vmatpush.msra.mxu0 0.0
    %58 = vmatpush.msra.mxu0 0.0
    %59 = vmatpush.msra.mxu0 0.0
    %60 = vmatpush.msra.mxu0 0.0
    %61 = vmatpush.msra.mxu0 0.0
    %62 = vmatpush.msra.mxu0 0.0
    %63 = vmatpush.msra.mxu0 %v26
    %64 = vmatpush.msra.mxu0 %v24
    %65 = vmatpush.msra.mxu0 %v22
    %66 = vmatpush.msra.mxu0 %v20
    %67 = vmatmul.f32.gmra.mxu0 %v29
    %v68 = vpop.f32.mrf.mxu0
    %v69 = vadd.f32 0.0, %v68
    %70 = vdwg.mxu0
    %v71 = vld [vmem:[%s3] sm:$0xff]
    %v72 = vld [vmem:[%s3 + $0x8] sm:$0xff]
    %v73 = vmul.f32 %v49, %v71
    %v74 = vmul.f32 %v69, %v72
    %v75 = vld [vmem:[%s2] sm:$0xff]
    %v76 = vld [vmem:[%s2 + $0x8] sm:$0xff]
    %v77 = vld [vmem:[%s2 + $0x10] sm:$0xff]
    %v78 = vld [vmem:[%s2 + $0x18] sm:$0xff]
    %v79 = vld [vmem:[%s2 + $0x20] sm:$0xff]
    %v80 = vld [vmem:[%s2 + $0x28] sm:$0xff]
    %v81 = vld [vmem:[%s2 + $0x30] sm:$0xff]
    %v82 = vld [vmem:[%s2 + $0x38] sm:$0xff]
    %v83 = vld [vmem:[%s2 + $0x40] sm:$0xff]
    %v84 = vld [vmem:[%s2 + $0x48] sm:$0xff]
    %v85 = vld [vmem:[%s2 + $0x50] sm:$0xff]
    %v86 = vld [vmem:[%s2 + $0x58] sm:$0xff]
    %v87 = vld [vmem:[%s2 + $0x60] sm:$0xff]
    %v88 = vld [vmem:[%s2 + $0x68] sm:$0xff]
    %v89 = vld [vmem:[%s2 + $0x70] sm:$0xff]
    %v90 = vld [vmem:[%s2 + $0x78] sm:$0xff]
    %v91 = vld [vmem:[%s2 + $0x80] sm:$0xff]
    %v92 = vld [vmem:[%s2 + $0x88] sm:$0xff]
    %v93 = vld [vmem:[%s2 + $0x90] sm:$0xff]
    %v94 = vld [vmem:[%s2 + $0x98] sm:$0xff]
    %v95 = vld [vmem:[%s2 + $0xa0] sm:$0xff]
    %v96 = vld [vmem:[%s2 + $0xa8] sm:$0xff]
    %v97 = vld [vmem:[%s2 + $0xb0] sm:$0xff]
    %v98 = vld [vmem:[%s2 + $0xb8] sm:$0xff]
    %v99 = vld [vmem:[%s2 + $0xc0] sm:$0xff]
    %v100 = vld [vmem:[%s2 + $0xc8] sm:$0xff]
    %v101 = vld [vmem:[%s2 + $0xd0] sm:$0xff]
    %v102 = vld [vmem:[%s2 + $0xd8] sm:$0xff]
    %v103 = vld [vmem:[%s2 + $0xe0] sm:$0xff]
    %v104 = vld [vmem:[%s2 + $0xe8] sm:$0xff]
    %v105 = vld [vmem:[%s2 + $0xf0] sm:$0xff]
    %v106 = vld [vmem:[%s2 + $0xf8] sm:$0xff]
    %107 = vmatpush.msra.mxu0 %v90
    %108 = vmatpush.msra.mxu0 %v89
    %109 = vmatpush.msra.mxu0 %v88
    %110 = vmatpush.msra.mxu0 %v87
    %111 = vmatpush.msra.mxu0 %v86
    %112 = vmatpush.msra.mxu0 %v85
    %113 = vmatpush.msra.mxu0 %v84
    %114 = vmatpush.msra.mxu0 %v83
    %115 = vmatpush.msra.mxu0 %v82
    %116 = vmatpush.msra.mxu0 %v81
    %117 = vmatpush.msra.mxu0 %v80
    %118 = vmatpush.msra.mxu0 %v79
    %119 = vmatpush.msra.mxu0 %v78
    %120 = vmatpush.msra.mxu0 %v77
    %121 = vmatpush.msra.mxu0 %v76
    %122 = vmatpush.msra.mxu0 %v75
    %123 = vmatmul.f32.gmra.mxu0 %v73
    %v124 = vpop.f32.mrf.mxu0
    %v125 = vadd.f32 0.0, %v124
    %126 = vdwg.mxu0
    %127 = vmatpush.msra.mxu0 %v106
    %128 = vmatpush.msra.mxu0 %v105
    %129 = vmatpush.msra.mxu0 %v104
    %130 = vmatpush.msra.mxu0 %v103
    %131 = vmatpush.msra.mxu0 %v102
    %132 = vmatpush.msra.mxu0 %v101
    %133 = vmatpush.msra.mxu0 %v100
    %134 = vmatpush.msra.mxu0 %v99
    %135 = vmatpush.msra.mxu0 %v98
    %136 = vmatpush.msra.mxu0 %v97
    %137 = vmatpush.msra.mxu0 %v96
    %138 = vmatpush.msra.mxu0 %v95
    %139 = vmatpush.msra.mxu0 %v94
    %140 = vmatpush.msra.mxu0 %v93
    %141 = vmatpush.msra.mxu0 %v92
    %142 = vmatpush.msra.mxu0 %v91
    %143 = vmatmul.f32.gmra.mxu0 %v74
    %v144 = vpop.f32.mrf.mxu0
    %v145 = vadd.f32 %v125, %v144
    %146 = vdwg.mxu0
    %147 = vxpose.xlu0.b32.start [1/16] %v145, 128
    %148 = vxpose.xlu0.b32.cont [2/16] 0.0, 128
    %149 = vxpose.xlu0.b32.cont [3/16] 0.0, 128
    %150 = vxpose.xlu0.b32.cont [4/16] 0.0, 128
    %151 = vxpose.xlu0.b32.cont [5/16] 0.0, 128
    %152 = vxpose.xlu0.b32.cont [6/16] 0.0, 128
    %153 = vxpose.xlu0.b32.cont [7/16] 0.0, 128
    %154 = vxpose.xlu0.b32.cont [8/16] 0.0, 128
    %155 = vxpose.xlu0.b32.cont [9/16] 0.0, 128
    %156 = vxpose.xlu0.b32.cont [10/16] 0.0, 128
    %157 = vxpose.xlu0.b32.cont [11/16] 0.0, 128
    %158 = vxpose.xlu0.b32.cont [12/16] 0.0, 128
    %159 = vxpose.xlu0.b32.cont [13/16] 0.0, 128
    %160 = vxpose.xlu0.b32.cont [14/16] 0.0, 128
    %161 = vxpose.xlu0.b32.cont [15/16] 0.0, 128
    %162 = vxpose.xlu0.b32.end [16/16] 0.0, 128
    %v163 = vpop.trf.xlu0
    %v164 = vpop.trf.xlu0
    %v165 = vpop.trf.xlu0
    %v166 = vpop.trf.xlu0
    %v167 = vpop.trf.xlu0
    %v168 = vpop.trf.xlu0
    %v169 = vpop.trf.xlu0
    %v170 = vpop.trf.xlu0
    %v171 = vpop.trf.xlu0
    %v172 = vpop.trf.xlu0
    %v173 = vpop.trf.xlu0
    %v174 = vpop.trf.xlu0
    %v175 = vpop.trf.xlu0
    %v176 = vpop.trf.xlu0
    %v177 = vpop.trf.xlu0
    %v178 = vpop.trf.xlu0
    %vm179 = vcmask 64512
    %180 = vst.msk [vmem:[#allocation2] sm:$0xff] %vm179, %v163
    // Predicated region
    $region18: #{tpu_custom_call.1} parent=1 // pred_check
      _
    $region19: #{tpu_custom_call.1} parent=1 // pred_check_branch
      %182 = sbr.rel (0) target = $region21
    $region20: #{tpu_custom_call.1} parent=1 // pred_region
      %184 = vsyncadd [#allocation3], 0
      %s186 = sshll.u32 [#allocation2], 4
      %s187 = int_to_ptr.vmem [resolvable:$true] %s186
      %s188 = sshll.u32 %s4, 4
      %s189 = int_to_ptr.hbm [resolvable:$true] %s188
      %191 = dma.vmem_to_hbm [thread:$0]  %s187, 128, %s189, [#allocation3]
    $region21: #{tpu_custom_call.1} parent=1 // pred_fallthru
      _
    // Predicated region
    $region22: #{tpu_custom_call.1} parent=1 // pred_check
      _
    $region23: #{tpu_custom_call.1} parent=1 // pred_check_branch
      %193 = sbr.rel (0) target = $region25
    $region24: #{tpu_custom_call.1} parent=1 // pred_region
      %195 = dma.done [#allocation3], 128
    $region25: #{tpu_custom_call.1} parent=1 // pred_fallthru
      _
    %196 = vsyncpa [#allocation3], 1

</llo_original>
